<compile_context>
chip_gen: v7x
topology: tpu7x:2x2x1
jax: 0.10.0
libtpu: 0.0.40
codegen_flags: <defaults>
</compile_context>

<pallas_src>
import jax
import jax.numpy as jnp
from jax.experimental import pallas as pl
from jax.experimental.pallas import tpu as pltpu  # noqa: F401  (TPU backend)

# Static conv configuration (from the module).
N, CIN, H, W = 5, 2, 10, 20
OC, KH, KW = 10, 3, 3
PAD, STRIDE, DIL = 3, 2, 3

HP, WP = H + 2 * PAD, W + 2 * PAD                  # padded spatial dims (16, 26)
OH = (HP - DIL * (KH - 1) - 1) // STRIDE + 1       # 5
OW = (WP - DIL * (KW - 1) - 1) // STRIDE + 1       # 10
KTOT = CIN * KH * KW                               # 18  (reduction dim)
M = N * OH * OW                                    # 250 (true output columns)
M_PAD = 256                                        # lane-dense (multiple of 128)


def conv_matmul_kernel(w_ref, p_ref, o_ref):
    # w_ref: (OC, KTOT)     flattened weights (OIHW -> O, CIN*KH*KW)
    # p_ref: (KTOT, M_PAD)  im2col patch matrix, lane-dense (256 lanes)
    # o_ref: (OC, M_PAD)    lane-dense output slab -> unmasked stores
    o_ref[...] = jnp.dot(w_ref[...], p_ref[...],
                         preferred_element_type=jnp.float32)


@jax.jit
def conv2d_pallas(x, w):
    """x: NCHW (N, CIN, H, W) f32; w: OIHW (OC, CIN, KH, KW) f32 -> NCHW out."""
    # ---- host-side layout plumbing (all fused by XLA inside this jit) ----
    # Transpose ONCE before slicing so the stacked taps come out already
    # ordered (cin, kh, kw) x (n, oh, ow): a single reshape, no 5-D transpose.
    xt = jnp.transpose(x, (1, 0, 2, 3))                              # (CIN, N, H, W)
    xp = jnp.pad(xt, ((0, 0), (0, 0), (PAD, PAD), (PAD, PAD)))       # (CIN, N, HP, WP)
    taps = []
    for kh in range(KH):
        for kw in range(KW):
            h0, w0 = kh * DIL, kw * DIL
            taps.append(
                xp[:, :,
                   h0:h0 + STRIDE * (OH - 1) + 1:STRIDE,
                   w0:w0 + STRIDE * (OW - 1) + 1:STRIDE])            # (CIN, N, OH, OW)
    patches = jnp.stack(taps, axis=1)                                # (CIN, KH*KW, N, OH, OW)
    patches = patches.reshape(KTOT, M)                               # (18, 250): row = cin*9+kh*3+kw
    patches = jnp.pad(patches, ((0, 0), (0, M_PAD - M)))             # (18, 256)  lane-dense
    w2d = w.reshape(OC, KTOT)                                        # (10, 18)

    # ---- single-shot kernel: whole arrays resident in VMEM, no grid ----
    out_slab = pl.pallas_call(
        conv_matmul_kernel,
        out_shape=jax.ShapeDtypeStruct((OC, M_PAD), jnp.float32),
        cost_estimate=pl.CostEstimate(
            flops=2 * OC * KTOT * M_PAD,
            bytes_accessed=4 * (OC * KTOT + KTOT * M_PAD + OC * M_PAD),
            transcendentals=0),
    )(w2d, patches)

    # (OC, 256) -> drop pad -> (OC, N, OH, OW) -> NCHW; fuses with consumer.
    return jnp.transpose(out_slab[:, :M].reshape(OC, N, OH, OW), (1, 0, 2, 3))


if __name__ == "__main__":
    key = jax.random.PRNGKey(0)
    kx, kw = jax.random.split(key)
    x = jax.random.normal(kx, (N, CIN, H, W), dtype=jnp.float32)
    # Deterministic synthetic weights (kaiming-uniform-like scale), OIHW.
    fan_in = CIN * KH * KW
    weight = jax.random.uniform(kw, (OC, CIN, KH, KW), dtype=jnp.float32,
                                minval=-1.0, maxval=1.0) / jnp.sqrt(fan_in)

    out = conv2d_pallas(x, weight)
    out = jax.block_until_ready(out)

    # Cross-check against XLA's native conv with identical hyper-params.
    ref = jax.lax.conv_general_dilated(
        x, weight,
        window_strides=(STRIDE, STRIDE),
        padding=((PAD, PAD), (PAD, PAD)),
        rhs_dilation=(DIL, DIL),
        dimension_numbers=("NCHW", "OIHW", "NCHW"))
    assert out.shape == (N, OC, OH, OW), out.shape
    assert jnp.allclose(out, ref, rtol=1e-4, atol=1e-4), "mismatch vs reference conv"

    print("KERNEL_OK")
</pallas_src>

<mosaic_0001>
module attributes {stable_mosaic.version = 11 : i64} {
  func.func @conv_matmul_kernel(%arg0: memref<10x18xf32, #tpu.memory_space<vmem>>, %arg1: memref<18x256xf32, #tpu.memory_space<vmem>>, %arg2: memref<10x256xf32, #tpu.memory_space<vmem>>) attributes {dimension_semantics = [], scalar_prefetch = 0 : i64, scratch_operands = 0 : i64, tpu.core_type = #tpu.core_type<tc>} {
    %c0 = arith.constant 0 : index
    %c0_0 = arith.constant 0 : index
    %0 = vector.load %arg0[%c0, %c0_0] : memref<10x18xf32, #tpu.memory_space<vmem>>, vector<10x18xf32>
    %c0_1 = arith.constant 0 : index
    %c0_2 = arith.constant 0 : index
    %1 = vector.load %arg1[%c0_1, %c0_2] : memref<18x256xf32, #tpu.memory_space<vmem>>, vector<18x256xf32>
    %cst = arith.constant dense<0.000000e+00> : vector<10x256xf32>
    %2 = tpu.matmul %0, %1, %cst {dimension_numbers = #tpu.dot_dimension_numbers<[1], [0], [0], [1], [0, 0, 1, 1], [], []>} : vector<10x18xf32>, vector<18x256xf32>, vector<10x256xf32> -> vector<10x256xf32>
    %c0_3 = arith.constant 0 : index
    %c0_4 = arith.constant 0 : index
    %3 = vector.load %arg2[%c0_3, %c0_4] : memref<10x256xf32, #tpu.memory_space<vmem>>, vector<10x256xf32>
    tpu.vector_store %arg2[%c0_3, %c0_4], %2 {strides = array<i32>} : memref<10x256xf32, #tpu.memory_space<vmem>>, vector<10x256xf32>,
    return
  }
}

</mosaic_0001>

<llo_original>
// kernel: conv2d_pallas.1
$region0: #{conv2d_pallas.1}
  #allocation0 [shape = 'u32[]', space=smem, size = 0x4, offset = 0x4, fixed_abs, tag = 'smem constant byte address 0x4 - core index']
  #allocation1 [shape = 'u32[144,128]{1,0:T(1,128)}', space=vmem, size = 0x12000, scoped, tag = 'internal scratch']
  %s0 = inlined_call_operand.vmem [shape: f32[10,18], index: 0, kind: input, shape index: {}]
  %s1 = inlined_call_operand.vmem [shape: f32[18,256], index: 1, kind: input, shape index: {}]
  %s2 = inlined_call_operand.vmem [shape: f32[10,256], index: 2, kind: output, shape index: {}]
  %s3 = sld [smem:[#allocation0]]
  $region18: #{conv2d_pallas.1} parent=0
    _
  %s5 = ssub.s32 1, %s3
  %s6 = scalar_select 0, %s5, %s3
  // Predicated region
  $region2: #{conv2d_pallas.1} parent=0 // pred_check
    _
  $region3: #{conv2d_pallas.1} parent=0 // pred_check_branch
    %8 = sbr.rel (0) target = $region5
  $region4: #{conv2d_pallas.1} parent=0 // pred_region
    _
  $region5: #{conv2d_pallas.1} parent=0 // pred_fallthru
    _
  // Predicated region
  $region6: #{conv2d_pallas.1} parent=0 // pred_check
    _
  $region7: #{conv2d_pallas.1} parent=0 // pred_check_branch
    %10 = sbr.rel (0) target = $region9
  $region8: #{conv2d_pallas.1} parent=0 // pred_region
    _
  $region9: #{conv2d_pallas.1} parent=0 // pred_fallthru
    _
  %v11 = vld [vmem:[%s0] sm:$0xff]
  %v12 = vld [vmem:[%s0 + $0x8] sm:$0x3]
  %v13 = vld [vmem:[%s1] sm:$0xff]
  %v14 = vld [vmem:[%s1 + $0x8] sm:$0xff]
  %v15 = vld [vmem:[%s1 + $0x10] sm:$0xff]
  %v16 = vld [vmem:[%s1 + $0x18] sm:$0xff]
  %v17 = vld [vmem:[%s1 + $0x20] sm:$0x3]
  %v18 = vld [vmem:[%s1 + $0x28] sm:$0x3]
  %vm19 = vcmask 146432
  %v21 = vsel %vm19, %v11, 0
  %v24 = vsel %vm19, %v12, 0
  %vm26 = vcmask 1041408
  %v28 = vsel %vm26, %v17, 0
  %v31 = vsel %vm26, %v18, 0
  %33 = vmatprep.subr.mxu0 %v14
  %34 = vmatpush1.msra.mxu0 %v13
  %35 = vmatprep.subr.mxu0 %v16
  %36 = vmatpush1.msra.mxu0 %v15
  %37 = vmatprep.subr.mxu0 %v31
  %38 = vmatpush1.msra.mxu0 %v28
  %39 = vmatprep.subr.mxu0 0.0
  %40 = vmatpush1.msra.mxu0 0.0
  %41 = vmatprep.subr.mxu0 0.0
  %42 = vmatpush1.msra.mxu0 0.0
  %43 = vmatprep.subr.mxu0 0.0
  %44 = vmatpush1.msra.mxu0 0.0
  %45 = vmatprep.subr.mxu0 0.0
  %46 = vmatpush1.msra.mxu0 0.0
  %47 = vmatprep.subr.mxu0 0.0
  %48 = vmatpush1.msra.mxu0 0.0
  %49 = vmatprep.subr.mxu0 0.0
  %50 = vmatpush1.msra.mxu0 0.0
  %51 = vmatprep.subr.mxu0 0.0
  %52 = vmatpush1.msra.mxu0 0.0
  %53 = vmatprep.subr.mxu0 0.0
  %54 = vmatpush1.msra.mxu0 0.0
  %55 = vmatprep.subr.mxu0 0.0
  %56 = vmatpush1.msra.mxu0 0.0
  %57 = vmatprep.subr.mxu0 0.0
  %58 = vmatpush1.msra.mxu0 0.0
  %59 = vmatprep.subr.mxu0 0.0
  %60 = vmatpush1.msra.mxu0 0.0
  %61 = vmatprep.subr.mxu0 0.0
  %62 = vmatpush1.msra.mxu0 0.0
  %63 = vmatprep.subr.mxu0 0.0
  %64 = vmatpush1.msra.mxu0 0.0
  %65 = vmatprep.subr.mxu0 0.0
  %66 = vmatpush1.msra.mxu0 0.0
  %67 = vmatprep.subr.mxu0 0.0
  %68 = vmatpush1.msra.mxu0 0.0
  %69 = vmatprep.subr.mxu0 0.0
  %70 = vmatpush1.msra.mxu0 0.0
  %71 = vmatprep.subr.mxu0 0.0
  %72 = vmatpush1.msra.mxu0 0.0
  %73 = vmatprep.subr.mxu0 0.0
  %74 = vmatpush1.msra.mxu0 0.0
  %75 = vmatprep.subr.mxu0 0.0
  %76 = vmatpush1.msra.mxu0 0.0
  %77 = vmatprep.subr.mxu0 0.0
  %78 = vmatpush1.msra.mxu0 0.0
  %79 = vmatprep.subr.mxu0 0.0
  %80 = vmatpush1.msra.mxu0 0.0
  %81 = vmatprep.subr.mxu0 0.0
  %82 = vmatpush1.msra.mxu0 0.0
  %83 = vmatprep.subr.mxu0 0.0
  %84 = vmatpush1.msra.mxu0 0.0
  %85 = vmatprep.subr.mxu0 0.0
  %86 = vmatpush1.msra.mxu0 0.0
  %87 = vmatprep.subr.mxu0 0.0
  %88 = vmatpush1.msra.mxu0 0.0
  %89 = vmatprep.subr.mxu0 0.0
  %90 = vmatpush1.msra.mxu0 0.0
  %91 = vmatprep.subr.mxu0 0.0
  %92 = vmatpush1.msra.mxu0 0.0
  %93 = vmatprep.subr.mxu0 0.0
  %94 = vmatpush1.msra.mxu0 0.0
  %95 = vmatprep.subr.mxu0 0.0
  %96 = vmatpush1.msra.mxu0 0.0
  %97 = vmatprep.mubr.f32.mxu0 0.0
  %98 = vmatmul.mubr.f32.gmra.mrb[0].mxu0 %v21
  %v99 = vpop.f32.mrb[0].mxu0
  %v100 = vadd.f32 0.0, %v99
  %v101 = vpop.f32.mrb[0].mxu0
  %v102 = vadd.f32 0.0, %v101
  %103 = vmatprep.mubr.f32.mxu0 0.0
  %104 = vmatmul.mubr.f32.gmra.mrb[0].mxu0 %v24
  %v105 = vpop.f32.mrb[0].mxu0
  %v106 = vadd.f32 0.0, %v105
  %v107 = vpop.f32.mrb[0].mxu0
  %v108 = vadd.f32 0.0, %v107
  %109 = vdwg.mxu0
  %110 = vst [vmem:[%s2] sm:$0xff] %v100
  %111 = vst [vmem:[%s2 + $0x8] sm:$0xff] %v102
  %112 = vst [vmem:[%s2 + $0x10] sm:$0x3] %v106
  %113 = vst [vmem:[%s2 + $0x18] sm:$0x3] %v108
  // Predicated region
  $region10: #{conv2d_pallas.1} parent=0 // pred_check
    _
  $region11: #{conv2d_pallas.1} parent=0 // pred_check_branch
    %115 = sbr.rel (0) target = $region13
  $region12: #{conv2d_pallas.1} parent=0 // pred_region
    _
  $region13: #{conv2d_pallas.1} parent=0 // pred_fallthru
    _
  // Predicated region
  $region14: #{conv2d_pallas.1} parent=0 // pred_check
    _
  $region15: #{conv2d_pallas.1} parent=0 // pred_check_branch
    %117 = sbr.rel (0) target = $region17
  $region16: #{conv2d_pallas.1} parent=0 // pred_region
    _
  $region17: #{conv2d_pallas.1} parent=0 // pred_fallthru
    _

</llo_original>
